<compile_context>
chip_gen: v7x
topology: tpu7x:2x2x1
jax: 0.10.0
libtpu: 0.0.40
codegen_flags: <defaults>
</compile_context>

<pallas_src>
import functools

import jax
import jax.numpy as jnp
from jax.experimental import pallas as pl
from jax.experimental.pallas import tpu as pltpu

LANES = 128
TM = 8192   # rows per block -> 8192 * 128 * 4 B = 4 MiB f32 per input block


def _rmse_partial_kernel(yhat_ref, y_ref, out_ref, *, rows, tm):
    """Writes the 128 per-lane partial sums of (yhat - y)^2 for this block."""
    i = pl.program_id(0)
    last = pl.num_programs(0) - 1

    d = yhat_ref[...].astype(jnp.float32) - y_ref[...].astype(jnp.float32)
    dd = d * d  # (tm, 128) f32

    if rows % tm:  # static: last block is partial -> mask out-of-bounds rows
        @pl.when(i == last)
        def _():
            row = jax.lax.broadcasted_iota(jnp.int32, dd.shape, 0)
            valid = (i * tm + row) < rows
            # Select (not arithmetic) so garbage/NaN in OOB rows cannot leak.
            out_ref[...] = jnp.sum(jnp.where(valid, dd, 0.0), axis=0, keepdims=True)

        @pl.when(i != last)
        def _():
            out_ref[...] = jnp.sum(dd, axis=0, keepdims=True)
    else:
        out_ref[...] = jnp.sum(dd, axis=0, keepdims=True)


def _choose_tm(rows):
    """Rows per block: as large as possible (<= TM) with a balanced, even block
    count so v7x's two TensorCores split the parallel grid evenly."""
    if rows <= 8:
        return rows
    nblk = max(2, pl.cdiv(rows, TM))
    if nblk > 2 and nblk % 2:
        nblk += 1                     # even block count for the 2-TC split
    tm = pl.cdiv(rows, nblk)
    return ((tm + 7) // 8) * 8        # sublane-align; stays <= TM


def _partial_sums(yh2d, y2d, rows, tm):
    num_blocks = pl.cdiv(rows, tm)
    itemsize = jnp.dtype(yh2d.dtype).itemsize
    kernel = functools.partial(_rmse_partial_kernel, rows=rows, tm=tm)
    return pl.pallas_call(
        kernel,
        out_shape=jax.ShapeDtypeStruct((1, num_blocks * LANES), jnp.float32),
        grid_spec=pltpu.PrefetchScalarGridSpec(
            num_scalar_prefetch=0,
            grid=(num_blocks,),
            in_specs=[
                pl.BlockSpec((tm, LANES), lambda i: (i, 0)),
                pl.BlockSpec((tm, LANES), lambda i: (i, 0)),
            ],
            out_specs=pl.BlockSpec((1, LANES), lambda i: (0, i)),
        ),
        compiler_params=pltpu.CompilerParams(
            dimension_semantics=("parallel",),      # independent blocks; v7x uses both TCs
            vmem_limit_bytes=32 * 1024 * 1024,      # needed on v5e (16 MiB default); safe everywhere
        ),
        cost_estimate=pl.CostEstimate(
            flops=3 * rows * LANES,
            transcendentals=0,
            bytes_accessed=2 * rows * LANES * itemsize + num_blocks * LANES * 4,
        ),
    )(yh2d, y2d)


@functools.partial(jax.jit, static_argnames=("coeff",))
def rmse_loss(yhat, y, coeff=1.0):
    assert yhat.shape == y.shape, "yhat and y must have the same shape"
    n = yhat.size

    flat_yhat = yhat.reshape(-1)
    flat_y = y.reshape(-1)

    rows = n // LANES
    rem = n % LANES

    # Ragged tail (< 128 elements): negligible, handled in plain JAX instead of
    # jnp.pad-ing both whole inputs (which tripled HBM traffic).
    if rem:
        t_yh = jax.lax.slice_in_dim(flat_yhat, rows * LANES, n).astype(jnp.float32)
        t_y = jax.lax.slice_in_dim(flat_y, rows * LANES, n).astype(jnp.float32)
        tail_sum = jnp.sum((t_yh - t_y) ** 2)
    else:
        tail_sum = jnp.float32(0.0)

    if rows == 0:
        total = tail_sum
    else:
        if rem:
            # TODO(synk): a memory_space=pl.ANY manual-DMA path could consume the
            #             ragged flat arrays directly and skip this prefix copy.
            yh2d = jax.lax.slice_in_dim(flat_yhat, 0, rows * LANES).reshape(rows, LANES)
            y2d = jax.lax.slice_in_dim(flat_y, 0, rows * LANES).reshape(rows, LANES)
        else:
            yh2d = flat_yhat.reshape(rows, LANES)   # free bitcast
            y2d = flat_y.reshape(rows, LANES)

        tm = _choose_tm(rows)
        partials = _partial_sums(yh2d, y2d, rows, tm)
        total = jnp.sum(partials) + tail_sum

    return jnp.float32(coeff) * jnp.sqrt(total / jnp.float32(n))


def _check(shape, key, coeff, dtype=jnp.float32, rtol=1e-5, atol=1e-6):
    k1, k2 = jax.random.split(key)
    yhat = jax.random.normal(k1, shape, dtype=jnp.float32).astype(dtype)
    y = jax.random.normal(k2, shape, dtype=jnp.float32).astype(dtype)
    loss = jax.block_until_ready(rmse_loss(yhat, y, coeff=coeff))
    diff = yhat.astype(jnp.float32) - y.astype(jnp.float32)
    ref = coeff * jnp.sqrt(jnp.mean(diff * diff))
    assert jnp.allclose(loss, ref, rtol=rtol, atol=atol), (shape, dtype, loss, ref)


if __name__ == "__main__":
    key = jax.random.PRNGKey(0)
    k_a, k_b, k_c = jax.random.split(key, 3)

    # Small NCHW-shaped input: n % 128 == 0 (free reshape), 2 balanced blocks.
    _check((2, 4, 16, 16), k_a, coeff=1.0)

    # Larger ragged shape: exercises the separate <128-element tail path,
    # the multi-block grid, and the masked partial last block.
    _check((2, 4, 182, 182), k_b, coeff=0.5)

    # bf16 inputs (half HBM traffic); kernel accumulates in f32.
    _check((2, 4, 16, 16), k_c, coeff=1.0, dtype=jnp.bfloat16, rtol=1e-4, atol=1e-5)

    print("KERNEL_OK")
</pallas_src>

<mosaic_0001>
module attributes {stable_mosaic.version = 11 : i64} {
  func.func @_rmse_partial_kernel(%arg0: i32, %arg1: memref<8x128xf32, #tpu.memory_space<vmem>>, %arg2: memref<8x128xf32, #tpu.memory_space<vmem>>, %arg3: memref<1x128xf32, #tpu.memory_space<vmem>>) attributes {dimension_semantics = [#tpu.dimension_semantics<parallel>], iteration_bounds = array<i64: 2>, scalar_prefetch = 0 : i64, scratch_operands = 0 : i64, tpu.core_type = #tpu.core_type<tc>, window_params = [{transform_indices = @transform_0, window_bounds = array<i64: 8, 128>}, {transform_indices = @transform_1, window_bounds = array<i64: 8, 128>}, {transform_indices = @transform_2, window_bounds = array<i64: 1, 128>}]} {
    %c0 = arith.constant 0 : index
    %c0_0 = arith.constant 0 : index
    %0 = vector.load %arg1[%c0, %c0_0] : memref<8x128xf32, #tpu.memory_space<vmem>>, vector<8x128xf32>
    %c0_1 = arith.constant 0 : index
    %c0_2 = arith.constant 0 : index
    %1 = vector.load %arg2[%c0_1, %c0_2] : memref<8x128xf32, #tpu.memory_space<vmem>>, vector<8x128xf32>
    %2 = arith.subf %0, %1 : vector<8x128xf32>
    %3 = arith.mulf %2, %2 : vector<8x128xf32>
    %cst = arith.constant dense<0.000000e+00> : vector<128xf32>
    %4 = vector.multi_reduction <add>, %3, %cst [0] : vector<8x128xf32> to vector<128xf32>
    %5 = vector.shape_cast %4 : vector<128xf32> to vector<1x128xf32>
    %c0_3 = arith.constant 0 : index
    %c0_4 = arith.constant 0 : index
    %6 = vector.load %arg3[%c0_3, %c0_4] : memref<1x128xf32, #tpu.memory_space<vmem>>, vector<1x128xf32>
    tpu.vector_store %arg3[%c0_3, %c0_4], %5 {strides = array<i32>} : memref<1x128xf32, #tpu.memory_space<vmem>>, vector<1x128xf32>,
    return
  }
  func.func @transform_0(%arg0: i32) -> (i32, i32) {
    %c0_i32 = arith.constant 0 : i32
    %c0_i32_0 = arith.constant 0 : i32
    return %arg0, %c0_i32 : i32, i32
  }
  func.func @transform_1(%arg0: i32) -> (i32, i32) {
    %c0_i32 = arith.constant 0 : i32
    %c0_i32_0 = arith.constant 0 : i32
    return %arg0, %c0_i32 : i32, i32
  }
  func.func @transform_2(%arg0: i32) -> (i32, i32) {
    %c0_i32 = arith.constant 0 : i32
    %c0_i32_0 = arith.constant 0 : i32
    return %c0_i32, %arg0 : i32, i32
  }
}

</mosaic_0001>

<llo_original>
// kernel: rmse_loss.1
$region0: #{rmse_loss.1}
  #allocation0 [shape = 'u32[]', space=smem, size = 0x4, offset = 0x4, fixed_abs, tag = 'smem constant byte address 0x4 - core index']
  #allocation1 [shape = 'u32[144,128]{1,0:T(1,128)}', space=vmem, size = 0x12000, scoped, tag = 'internal scratch']
  %s0 = inlined_call_operand.vmem [shape: f32[16,128], index: 0, kind: input, shape index: {}]
  %s1 = inlined_call_operand.vmem [shape: f32[16,128], index: 1, kind: input, shape index: {}]
  %s2 = inlined_call_operand.vmem [shape: f32[1,256], index: 2, kind: output, shape index: {}]
  %s3 = sld [smem:[#allocation0]]
  $region41: #{rmse_loss.1} parent=0
    _
  %s5 = ssub.s32 1, %s3
  %s6 = scalar_select 0, %s5, %s3
  loop: start=0, step=1, limit=4
  $region2: #{rmse_loss.1} parent=0 // loop_pre_header
    _
  $region3: #{rmse_loss.1} parent=0 // loop_header
    %s8 = sphi 0, %s12
    %p9 = scmp.ge.s32.totalorder %s8, 4
    %s18 = sphi 0, %s20
    %s21 = sphi 0, %s18
    %s22 = sphi 0, %s21
    %s38 = sphi 0, %s22
    %s44 = sphi 0, %s46
    %s47 = sphi 0, %s44
    %s48 = sphi 0, %s47
    %s64 = sphi 0, %s48
    %s70 = sphi 0, %s72
    %s73 = sphi 0, %s70
    %s74 = sphi 0, %s73
    %s90 = sphi 0, %s74
  $region4: #{rmse_loss.1} parent=0 // loop_header_branch
    %11 = sbr.rel (%p9) target = $region8
  $region5: #{rmse_loss.1} parent=0 // loop_body
    %s13 = ssub.s32 %s8, 1
    %s14 = ssub.s32 %s8, 2
    %s15 = sadd.s32 %s8, 1
    %s16 = ssub.s32 %s8, %s15
    %p17 = scmp.eq.s32.totalorder %s16, 0
    %s19 = sadd.s32 %s18, 1
    %s20 = scalar_select %p17, %s18, %s19
    %p23 = pneg %p17
    %p24 = scmp.eq.s32.totalorder %s8, 1
    %p25 = por %p23, %p24
    %p26 = scmp.ne.s32.totalorder %s18, %s21
    %p27 = scmp.eq.s32.totalorder %s8, 0
    %p28 = por %p26, %p27
    %p29 = scmp.ne.s32.totalorder %s18, %s21
    %p30 = scmp.eq.s32.totalorder %s13, 1
    %p31 = por %p29, %p30
    %p32 = scmp.ne.s32.totalorder %s21, %s22
    %p33 = scmp.eq.s32.totalorder %s13, 0
    %p34 = por %p32, %p33
    %p35 = scmp.ne.s32.totalorder %s21, %s22
    %p36 = scmp.eq.s32.totalorder %s14, 1
    %p37 = por %p35, %p36
    %p39 = scmp.ne.s32.totalorder %s22, %s38
    %p40 = scmp.eq.s32.totalorder %s14, 0
    %p41 = por %p39, %p40
    %s42 = ssub.s32 %s8, %s15
    %p43 = scmp.eq.s32.totalorder %s42, 0
    %s45 = sadd.s32 %s44, 1
    %s46 = scalar_select %p43, %s44, %s45
    %p49 = pneg %p43
    %p50 = scmp.eq.s32.totalorder %s8, 1
    %p51 = por %p49, %p50
    %p52 = scmp.ne.s32.totalorder %s44, %s47
    %p53 = scmp.eq.s32.totalorder %s8, 0
    %p54 = por %p52, %p53
    %p55 = scmp.ne.s32.totalorder %s44, %s47
    %p56 = scmp.eq.s32.totalorder %s13, 1
    %p57 = por %p55, %p56
    %p58 = scmp.ne.s32.totalorder %s47, %s48
    %p59 = scmp.eq.s32.totalorder %s13, 0
    %p60 = por %p58, %p59
    %p61 = scmp.ne.s32.totalorder %s47, %s48
    %p62 = scmp.eq.s32.totalorder %s14, 1
    %p63 = por %p61, %p62
    %p65 = scmp.ne.s32.totalorder %s48, %s64
    %p66 = scmp.eq.s32.totalorder %s14, 0
    %p67 = por %p65, %p66
    %s68 = ssub.s32 %s8, %s15
    %p69 = scmp.eq.s32.totalorder %s68, 0
    %s71 = sadd.s32 %s70, 1
    %s72 = scalar_select %p69, %s70, %s71
    %p75 = pneg %p69
    %p76 = scmp.eq.s32.totalorder %s8, 1
    %p77 = por %p75, %p76
    %p78 = scmp.ne.s32.totalorder %s70, %s73
    %p79 = scmp.eq.s32.totalorder %s8, 0
    %p80 = por %p78, %p79
    %p81 = scmp.ne.s32.totalorder %s70, %s73
    %p82 = scmp.eq.s32.totalorder %s13, 1
    %p83 = por %p81, %p82
    %p84 = scmp.ne.s32.totalorder %s73, %s74
    %p85 = scmp.eq.s32.totalorder %s13, 0
    %p86 = por %p84, %p85
    %p87 = scmp.ne.s32.totalorder %s73, %s74
    %p88 = scmp.eq.s32.totalorder %s14, 1
    %p89 = por %p87, %p88
    %p91 = scmp.ne.s32.totalorder %s74, %s90
    %p92 = scmp.eq.s32.totalorder %s14, 0
    %p93 = por %p91, %p92
    %p94 = scmp.le.s32.totalorder 1, %s8
    %p95 = scmp.lt.s32.totalorder %s8, 3
    %p96 = pnand %p94, %p95
    %p97 = pneg %p96
    // Predicated region
    $region9: #{rmse_loss.1} parent=5 // pred_check
      _
    $region10: #{rmse_loss.1} parent=5 // pred_check_branch
      %99 = sbr.rel (%p96) target = $region12
    $region11: #{rmse_loss.1} parent=5 // pred_region
      %s100 = ssub.s32 %s8, 1
    $region12: #{rmse_loss.1} parent=5 // pred_fallthru
      _
    %p101 = scmp.lt.s32.totalorder %s8, 2
    // Predicated region
    $region13: #{rmse_loss.1} parent=5 // pred_check
      %p102 = pneg %p101
    $region14: #{rmse_loss.1} parent=5 // pred_check_branch
      %104 = sbr.rel (%p102) target = $region16
    $region15: #{rmse_loss.1} parent=5 // pred_region
      // Predicated region
      $region17: #{rmse_loss.1} parent=15 // pred_check
        %p105 = pneg %p28
      $region18: #{rmse_loss.1} parent=15 // pred_check_branch
        %107 = sbr.rel (%p105) target = $region20
      $region19: #{rmse_loss.1} parent=15 // pred_region
        %p108 = scmp.lt.s32.totalorder %s8, 1
        %s109 = scalar_select %p108, %s8, 1
        %s110 = smul.addr %s109, 8
        %s111 = scalar_lea.vmem %s0, %s110
      $region20: #{rmse_loss.1} parent=15 // pred_fallthru
        _
      // Predicated region
      $region21: #{rmse_loss.1} parent=15 // pred_check
        %p112 = pneg %p54
      $region22: #{rmse_loss.1} parent=15 // pred_check_branch
        %114 = sbr.rel (%p112) target = $region24
      $region23: #{rmse_loss.1} parent=15 // pred_region
        %p115 = scmp.lt.s32.totalorder %s8, 1
        %s116 = scalar_select %p115, %s8, 1
        %s117 = smul.addr %s116, 8
        %s118 = scalar_lea.vmem %s1, %s117
      $region24: #{rmse_loss.1} parent=15 // pred_fallthru
        _
    $region16: #{rmse_loss.1} parent=5 // pred_fallthru
      _
    %p119 = scmp.le.s32.totalorder 1, %s8
    %p120 = scmp.lt.s32.totalorder %s8, 3
    %p121 = pnand %p119, %p120
    %p122 = pneg %p121
    // Predicated region
    $region25: #{rmse_loss.1} parent=5 // pred_check
      _
    $region26: #{rmse_loss.1} parent=5 // pred_check_branch
      %124 = sbr.rel (%p121) target = $region28
    $region27: #{rmse_loss.1} parent=5 // pred_region
      %s125 = ssub.s32 %s8, 1
      %p126 = scmp.lt.s32.totalorder %s13, 1
      %s127 = scalar_select %p126, %s13, 1
      %s128 = smul.addr %s127, 8
      %s129 = scalar_lea.vmem %s0, %s128
      %p130 = pneg %p34
      %p131 = pneg %p31
      %p132 = scmp.lt.s32.totalorder %s13, 1
      %s133 = scalar_select %p132, %s13, 1
      %s134 = smul.addr %s133, 8
      %s135 = scalar_lea.vmem %s1, %s134
      %p136 = pneg %p60
      %p137 = pneg %p57
      %p138 = pneg %p86
      %p139 = pneg %p83
      %p140 = scmp.lt.s32.totalorder %s13, 1
      %s141 = scalar_select %p140, %s13, 1
      %s142 = scalar_lea.vmem %s2, %s141
      %p143 = scmp.lt.s32.totalorder %s13, 1
      %s144 = scalar_select %p143, %s13, 1
      %s145 = smul.addr %s144, 8
      %s146 = scalar_lea.vmem %s0, %s145
      %p147 = scmp.lt.s32.totalorder %s13, 1
      %s148 = scalar_select %p147, %s13, 1
      %s149 = smul.addr %s148, 8
      %s150 = scalar_lea.vmem %s1, %s149
      %p151 = scmp.lt.s32.totalorder %s13, 1
      %s152 = scalar_select %p151, %s13, 1
      %s153 = scalar_lea.vmem %s2, %s152
      %v154 = vld [vmem:[%s146] sm:$0xff]
      %v155 = vld [vmem:[%s150] sm:$0xff]
      %v156 = vsub.f32 %v154, %v155
      %v157 = vmul.f32 %v156, %v156
      %v158 = vrot.slane %v157, 4
      %v159 = vadd.f32 %v157, %v158
      %v160 = vrot.slane %v159, 2
      %v161 = vadd.f32 %v159, %v160
      %v162 = vrot.slane %v161, 1
      %v163 = vadd.f32 %v161, %v162
      %164 = vst [vmem:[%s153] sm:$0x1] %v163
      %p165 = scmp.lt.s32.totalorder %s13, 1
      %s166 = scalar_select %p165, %s13, 1
      %s167 = scalar_lea.vmem %s2, %s166
      // Predicated region
      $region29: #{rmse_loss.1} parent=27 // pred_check
        %p168 = pneg %p83
      $region30: #{rmse_loss.1} parent=27 // pred_check_branch
        %170 = sbr.rel (%p168) target = $region32
      $region31: #{rmse_loss.1} parent=27 // pred_region
        _
      $region32: #{rmse_loss.1} parent=27 // pred_fallthru
        _
    $region28: #{rmse_loss.1} parent=5 // pred_fallthru
      _
    %p171 = scmp.le.s32.totalorder 2, %s8
    // Predicated region
    $region33: #{rmse_loss.1} parent=5 // pred_check
      %p172 = pneg %p171
    $region34: #{rmse_loss.1} parent=5 // pred_check_branch
      %174 = sbr.rel (%p172) target = $region36
    $region35: #{rmse_loss.1} parent=5 // pred_region
      %s175 = ssub.s32 %s8, 2
      // Predicated region
      $region37: #{rmse_loss.1} parent=35 // pred_check
        %p176 = pneg %p89
      $region38: #{rmse_loss.1} parent=35 // pred_check_branch
        %178 = sbr.rel (%p176) target = $region40
      $region39: #{rmse_loss.1} parent=35 // pred_region
        %p179 = scmp.lt.s32.totalorder %s14, 1
        %s180 = scalar_select %p179, %s14, 1
        %s181 = scalar_lea.vmem %s2, %s180
      $region40: #{rmse_loss.1} parent=35 // pred_fallthru
        _
    $region36: #{rmse_loss.1} parent=5 // pred_fallthru
      _
  $region6: #{rmse_loss.1} parent=0 // loop_footer
    %s12 = sadd.s32 1, %s8
  $region7: #{rmse_loss.1} parent=0 // loop_footer_branch
    %7 = sbr.rel target = $region3
  $region8: #{rmse_loss.1} parent=0 // loop_exit
    _

</llo_original>
